<compile_context>
chip_gen: v7x
topology: tpu7x:2x2x1
jax: 0.10.0
libtpu: 0.0.40
codegen_flags: <defaults>
</compile_context>

<pallas_src>
import jax
import jax.numpy as jnp
from jax.experimental import pallas as pl
from jax.experimental.pallas import tpu as pltpu

# Arrays at least this big get the multi-DMA chunked copy (~64 MiB).
_CHUNK_THRESHOLD_BYTES = 64 * 1024 * 1024
_MAX_CHUNKS = 8


def _make_hbm_copy_kernel(num_chunks: int, chunk_rows: int):
    """HBM->HBM copy: `num_chunks` outstanding DMAs along the leading axis."""

    def kernel(x_hbm, o_hbm, sems):
        copies = []
        # Issue every DMA before waiting on any of them so multiple descriptors
        # are in flight concurrently (spreads across DMA channels).
        for c in range(num_chunks):
            sl = pl.ds(c * chunk_rows, chunk_rows)
            cp = pltpu.make_async_copy(x_hbm.at[sl], o_hbm.at[sl], sems.at[c])
            cp.start()
            copies.append(cp)
        for cp in copies:
            cp.wait()

    return kernel


def _pick_num_chunks(x: jax.Array) -> int:
    """Choose a static chunk count: 1 for small arrays, up to 8 for big ones."""
    nbytes = x.size * jnp.dtype(x.dtype).itemsize
    if nbytes < _CHUNK_THRESHOLD_BYTES or x.ndim == 0:
        return 1
    lead = x.shape[0]
    # Largest divisor of the leading dim that is <= _MAX_CHUNKS.
    for n in range(min(_MAX_CHUNKS, lead), 0, -1):
        if lead % n == 0:
            return n
    return 1


def identity(x: jax.Array, *, materialize: bool = False,
             num_chunks: int | None = None) -> jax.Array:
    """Identity mapping; shape/dtype preserved exactly.

    x: (batch, n_channels, seq_len)

    materialize=False (default): return the input unchanged — the correct,
        free implementation of an identity op (no kernel, no HBM traffic).
    materialize=True: produce a physically distinct buffer via HBM->HBM DMA
        inside a Pallas kernel (chunked for large arrays).
    num_chunks: optional override of the DMA chunk count (must divide the
        leading dim); mainly for testing.
    """
    if not materialize:
        # Highest-value optimization: identity should be free.
        return x

    if num_chunks is None:
        num_chunks = _pick_num_chunks(x)
    lead = x.shape[0] if x.ndim > 0 else 1
    assert lead % num_chunks == 0, "num_chunks must divide the leading dim"
    chunk_rows = lead // num_chunks

    itemsize = jnp.dtype(x.dtype).itemsize
    cost = pl.CostEstimate(
        flops=0,
        transcendentals=0,
        bytes_accessed=2 * x.size * itemsize,  # read + write
    )

    return pl.pallas_call(
        _make_hbm_copy_kernel(num_chunks, chunk_rows),
        out_shape=jax.ShapeDtypeStruct(x.shape, x.dtype),
        in_specs=[pl.BlockSpec(memory_space=pl.ANY)],
        out_specs=pl.BlockSpec(memory_space=pl.ANY),
        scratch_shapes=[pltpu.SemaphoreType.DMA((num_chunks,))],
        cost_estimate=cost,
    )(x)


if __name__ == "__main__":
    key = jax.random.PRNGKey(0)
    # Module shape convention: (n_channels, seq_len); add a small batch dim.
    batch, n_channels, seq_len = 2, 4, 16
    x = jax.random.normal(key, (batch, n_channels, seq_len), dtype=jnp.float32)

    # Fast path: pure identity (no kernel launch).
    y_fast = identity(x)
    jax.block_until_ready(y_fast)
    assert y_fast.shape == x.shape and y_fast.dtype == x.dtype
    assert jnp.array_equal(y_fast, x)

    # Materialized-copy path: single whole-array HBM->HBM DMA.
    y_copy = identity(x, materialize=True)
    jax.block_until_ready(y_copy)
    assert y_copy.shape == x.shape and y_copy.dtype == x.dtype
    assert jnp.array_equal(y_copy, x)

    # Exercise the chunked (multiple outstanding DMAs) path explicitly.
    y_chunked = identity(x, materialize=True, num_chunks=2)
    jax.block_until_ready(y_chunked)
    assert y_chunked.shape == x.shape and y_chunked.dtype == x.dtype
    assert jnp.array_equal(y_chunked, x)

    print("KERNEL_OK")
</pallas_src>

<mosaic_0001>
module attributes {stable_mosaic.version = 11 : i64} {
  func.func @kernel(%arg0: memref<2x4x16xf32, #tpu.memory_space<any>>, %arg1: memref<2x4x16xf32, #tpu.memory_space<any>>, %arg2: memref<1x!tpu.dma_semaphore, #tpu.memory_space<semaphore_mem>>) attributes {dimension_semantics = [], scalar_prefetch = 0 : i64, scratch_operands = 1 : i64, tpu.core_type = #tpu.core_type<tc>} {
    %c0_i32 = arith.constant 0 : i32
    %c0_i32_0 = arith.constant 0 : i32
    %c0_i32_1 = arith.constant 0 : i32
    %c0_i32_2 = arith.constant 0 : i32
    %0 = tpu.memref_slice %arg0[%c0_i32_0, %c0_i32_1, %c0_i32_2] : memref<2x4x16xf32, #tpu.memory_space<any>> -> memref<2x4x16xf32, #tpu.memory_space<any>>
    %c0_i32_3 = arith.constant 0 : i32
    %c0_i32_4 = arith.constant 0 : i32
    %c0_i32_5 = arith.constant 0 : i32
    %1 = tpu.memref_slice %arg1[%c0_i32_3, %c0_i32_4, %c0_i32_5] : memref<2x4x16xf32, #tpu.memory_space<any>> -> memref<2x4x16xf32, #tpu.memory_space<any>>
    %2 = tpu.memref_slice %arg2[%c0_i32] : memref<1x!tpu.dma_semaphore, #tpu.memory_space<semaphore_mem>> -> memref<1x!tpu.dma_semaphore, #tpu.memory_space<semaphore_mem>>
    %3 = tpu.memref_squeeze %2 : memref<1x!tpu.dma_semaphore, #tpu.memory_space<semaphore_mem>> -> memref<!tpu.dma_semaphore, #tpu.memory_space<semaphore_mem>>
    tpu.enqueue_dma source(%0 : memref<2x4x16xf32, #tpu.memory_space<any>>) target(%1 : memref<2x4x16xf32, #tpu.memory_space<any>>) target_semaphore(%3 : memref<!tpu.dma_semaphore, #tpu.memory_space<semaphore_mem>>)
    %c0_i32_6 = arith.constant 0 : i32
    %c0_i32_7 = arith.constant 0 : i32
    %c0_i32_8 = arith.constant 0 : i32
    %c0_i32_9 = arith.constant 0 : i32
    %4 = tpu.memref_slice %arg0[%c0_i32_7, %c0_i32_8, %c0_i32_9] : memref<2x4x16xf32, #tpu.memory_space<any>> -> memref<2x4x16xf32, #tpu.memory_space<any>>
    %c0_i32_10 = arith.constant 0 : i32
    %c0_i32_11 = arith.constant 0 : i32
    %c0_i32_12 = arith.constant 0 : i32
    %5 = tpu.memref_slice %arg1[%c0_i32_10, %c0_i32_11, %c0_i32_12] : memref<2x4x16xf32, #tpu.memory_space<any>> -> memref<2x4x16xf32, #tpu.memory_space<any>>
    %6 = tpu.memref_slice %arg2[%c0_i32_6] : memref<1x!tpu.dma_semaphore, #tpu.memory_space<semaphore_mem>> -> memref<1x!tpu.dma_semaphore, #tpu.memory_space<semaphore_mem>>
    %7 = tpu.memref_squeeze %6 : memref<1x!tpu.dma_semaphore, #tpu.memory_space<semaphore_mem>> -> memref<!tpu.dma_semaphore, #tpu.memory_space<semaphore_mem>>
    tpu.wait_dma2 semaphore(%7 : memref<!tpu.dma_semaphore, #tpu.memory_space<semaphore_mem>>) src(%4 : memref<2x4x16xf32, #tpu.memory_space<any>>) dst(%5 : memref<2x4x16xf32, #tpu.memory_space<any>>)
    return
  }
}

</mosaic_0001>

<llo_original>
// kernel: tpu_custom_call.1
$region0: #{tpu_custom_call.1}
  #allocation0 [shape = 'u32[]', space=smem, size = 0x4, offset = 0x4, fixed_abs, tag = 'smem constant byte address 0x4 - core index']
  #allocation1 [shape = 'u32[144,128]{1,0:T(1,128)}', space=vmem, size = 0x12000, scoped, tag = 'internal scratch']
  #allocation2 [shape = 's32[1]{0}', space=sflag, size = 0x4, scoped, tag = 'scratch operand']
  #allocation3 [shape = 's32[]', space=sflag, size = 0x4, offset = 0, fixed_abs, tag = 'sflag constant byte address 0x0 - dummy sync flag']
  #allocation4 [shape = 'u32[0]{0}', space=smem, size = 0, offset = 0, fixed_abs, tag = 'smem constant byte address 0x0 - null']
  %s0 = inlined_call_operand.hbm [shape: f32[2,4,16], index: 0, kind: input, shape index: {}]
  %s1 = inlined_call_operand.hbm [shape: f32[2,4,16], index: 1, kind: output, shape index: {}]
  %s2 = sld [smem:[#allocation0]]
  $region2: #{tpu_custom_call.1} parent=0
    _
  %s4 = ssub.s32 1, %s2
  %s5 = scalar_select 0, %s4, %s2
  %s7 = sshll.u32 1, 14
  %s8 = sxor.u32 4294967295, %s7
  %s11 = sshll.u32 3, 24
  %s12 = sxor.u32 4294967295, %s11
  %s13 = sand.u32 0, %s12
  %s15 = sor.u32 %s13, 0
  %18 = dma.general %s0, 128, %s1, [#allocation2], [#allocation3], [#allocation4], %s15, 0
  %s19 = smul.u32 2, 4
  %s20 = smul.u32 %s19, 1
  %s21 = sshll.u32 %s20, 4
  %22 = dma.done [#allocation2], %s21
  %23 = vsyncmov [#allocation2]
  %s24 = vpop.sfrf %23
  %p25 = scmp.eq.s32.totalorder %s24, 0
  %p26 = pneg %p25
  %28 = shalt.err (%p26)

</llo_original>
